<compile_context>
chip_gen: v5e
topology: v5e:2x2
jax: 0.10.0
libtpu: 0.0.40
codegen_flags: <defaults>
</compile_context>

<pallas_src>
import functools

import jax
import jax.numpy as jnp
from jax.experimental import pallas as pl
from jax.experimental.pallas import tpu as pltpu


# ---------------------------------------------------------------------------
# Hardware-aware sizing helpers
# ---------------------------------------------------------------------------

def _tpu_params():
    """Generation-aware sizing knobs with safe fallbacks."""
    kind = ""
    try:
        kind = jax.devices()[0].device_kind.lower()
    except Exception:
        pass
    # 2 TensorCores per chip: v4 / v5p / v7x.  v5e / v6e are single-TC.
    num_tc = 2 if any(tag in kind for tag in ("v4", "v5p", "7")) else 1
    is_v5e = ("v5 lite" in kind) or ("v5e" in kind) or ("v5lite" in kind)
    if is_v5e:
        per_operand_target = 2 << 20      # ~2 MiB / operand / grid step
        default_vmem = 128 << 20
    elif "7" in kind:
        per_operand_target = 4 << 20      # ~4 MiB / operand / grid step
        default_vmem = 64 << 20           # v7x: 64 MiB per TC
    else:                                 # v6e and unknown chips
        per_operand_target = 4 << 20
        default_vmem = 128 << 20
    vmem_cap = 0
    try:
        vmem_cap = int(pltpu.get_tpu_info().vmem_capacity_bytes)
    except Exception:
        vmem_cap = 0
    if vmem_cap <= 0:
        vmem_cap = default_vmem
    return dict(kind=kind, num_tc=num_tc, is_v5e=is_v5e,
                per_operand_target=per_operand_target, vmem_cap=vmem_cap)


def _padded_block_bytes(block_shape, dtype):
    """VMEM footprint of one block after (sublane, lane) tile padding."""
    itemsize = jnp.dtype(dtype).itemsize
    sublane = max(1, 32 // (8 * itemsize)) * 8    # 8 (f32), 16 (bf16), 32 (i8)
    dims = list(block_shape)
    dims[-1] = -(-int(dims[-1]) // 128) * 128
    if len(dims) >= 2:
        dims[-2] = -(-int(dims[-2]) // sublane) * sublane
    n = 1
    for d in dims:
        n *= int(d)
    return n * itemsize


def _batch_cap(B, hw, block_batch):
    cap = B
    if block_batch is not None:
        cap = min(cap, max(1, int(block_batch)))
    # >= 2 grid steps *per TensorCore*, but only on 2-TC chips and only when
    # the batch allows it (on 1-TC chips the clamp would just shrink slabs).
    if hw["num_tc"] >= 2 and B >= 2 * hw["num_tc"]:
        cap = min(cap, B // (2 * hw["num_tc"]))
    return max(cap, 1)


def _pick_tb(B, block_shape_of, dtype, hw, block_batch, needs_sublane_rule):
    """Largest divisor of B under the per-operand HBM target that also fits the
    double-buffered VMEM budget.  If the batch dim is the second-to-last block
    dim (collapsed-C path) it must be a multiple of 8 or the full batch."""
    cap = _batch_cap(B, hw, block_batch)
    budget = int(0.45 * hw["vmem_cap"])            # 3 operands x 2 buffers
    target = hw["per_operand_target"]
    itemsize = jnp.dtype(dtype).itemsize

    def raw_bytes(tb):
        n = 1
        for d in block_shape_of(tb):
            n *= int(d)
        return n * itemsize

    cands = []
    for tb in range(1, B + 1):
        if B % tb or tb > cap:
            continue
        if needs_sublane_rule and not (tb % 8 == 0 or tb == B):
            continue
        if 6 * _padded_block_bytes(block_shape_of(tb), dtype) > budget:
            continue
        cands.append(tb)
    if not cands:
        return 0
    under = [tb for tb in cands if raw_bytes(tb) <= target]
    return max(under) if under else min(cands)


def _vmem_limit(block_bytes, hw):
    needed = 6 * block_bytes + (2 << 20)           # 3 operands x 2 buffers + margin
    lo = 16 << 20
    hi = max(lo, hw["vmem_cap"] - (8 << 20))
    return int(min(max(needed, lo), hi))


# ---------------------------------------------------------------------------
# Kernels
# ---------------------------------------------------------------------------

def _cross_gate_kernel_lanes(params_ref, seq_ref, shp_ref, out_ref, *,
                             C, L, gate_dtype):
    """Small-C path: C collapsed into lanes.  Blocks are (tb, C*L); params is a
    (2C+1,) f32 SMEM array laid out as [w_seq(0..C-1), w_shp(0..C-1), bias]."""
    seq = seq_ref[...]                                    # (tb, C*L), native dtype
    shp = shp_ref[...]

    # Conv1d(2C -> 1, k=1): per-position channel reduction as C static lane
    # slices (C < 8 on this path), accumulated in f32; scalar weights from SMEM.
    acc = None
    for c in range(C):
        term = (params_ref[c] * seq[:, c * L:(c + 1) * L].astype(jnp.float32)
                + params_ref[C + c] * shp[:, c * L:(c + 1) * L].astype(jnp.float32))
        acc = term if acc is None else acc + term
    z = jnp.maximum(acc + params_ref[2 * C], 0.0)         # (tb, L)  ReLU

    # Exact softmax over L (kernel is HBM-bound; exact divide is free).
    m = jnp.max(z, axis=-1, keepdims=True)
    e = jnp.exp(z - m)
    w = e / jnp.sum(e, axis=-1, keepdims=True)            # (tb, L)

    # Gate the shape/heatmap branch: tile weights across the C lane groups.
    w_full = jnp.concatenate([w] * C, axis=-1).astype(gate_dtype)     # (tb, C*L)
    out_ref[...] = (shp.astype(gate_dtype) * w_full).astype(out_ref.dtype)


def _cross_gate_kernel_3d(wfused_ref, bias_ref, seq_ref, shp_ref, out_ref, *,
                          gate_dtype):
    """Generic path: blocks are (tb, C, L); wfused is (2, C, 1) f32 in VMEM
    (row 0 gates seq, row 1 gates shape_or_hm), bias is (1,) f32 in SMEM."""
    seq = seq_ref[...].astype(jnp.float32)                # (tb, C, L)
    shp = shp_ref[...]                                    # native dtype

    w_seq = wfused_ref[0]                                 # (C, 1)
    w_shp = wfused_ref[1]

    # Conv1d(2C -> 1, k=1) == VPU multiply + cross-sublane (XLU) reduce.
    logits = jnp.sum(w_seq[None, :, :] * seq
                     + w_shp[None, :, :] * shp.astype(jnp.float32),
                     axis=1, keepdims=True) + bias_ref[0]             # (tb, 1, L)
    z = jnp.maximum(logits, 0.0)

    m = jnp.max(z, axis=-1, keepdims=True)
    e = jnp.exp(z - m)
    w = e / jnp.sum(e, axis=-1, keepdims=True)            # (tb, 1, L)

    out_ref[...] = (shp.astype(gate_dtype) * w.astype(gate_dtype)).astype(out_ref.dtype)


# ---------------------------------------------------------------------------
# Wrapper
# ---------------------------------------------------------------------------

def cross_gate(seq, shape_or_hm, conv_weight, conv_bias, *, block_batch=None):
    """seq, shape_or_hm: (B, C, L).  conv_weight: (1, 2C, 1), conv_bias: (1,)."""
    B, C, L = seq.shape
    assert shape_or_hm.shape == (B, C, L)
    assert conv_weight.shape == (1, 2 * C, 1)

    out_dtype = shape_or_hm.dtype
    itemsize = jnp.dtype(seq.dtype).itemsize
    hw = _tpu_params()

    # bf16 gating multiply stays in bf16 on chips with a bf16 VPU (v6e/v7x);
    # logits / softmax always accumulate in f32.
    if jnp.dtype(out_dtype) == jnp.dtype(jnp.bfloat16) and not hw["is_v5e"]:
        gate_dtype = jnp.bfloat16
    else:
        gate_dtype = jnp.float32

    cost = pl.CostEstimate(
        flops=int(B * L * (5 * C + 10)),
        transcendentals=int(B * L),
        bytes_accessed=int(3 * B * C * L * itemsize + (2 * C + 1) * 4))
    sem = ("parallel",)

    # ---- Path A: small C collapsed into the lane axis ----------------------
    tb = 0
    if C < 8:
        tb = _pick_tb(B, lambda t: (t, C * L), seq.dtype, hw, block_batch,
                      needs_sublane_rule=True)
    if tb:
        nb = B // tb
        vmem_limit = _vmem_limit(_padded_block_bytes((tb, C * L), seq.dtype), hw)
        # torch.cat((seq, shape_or_hm), dim=1) ordering -> first C weights gate seq.
        params = jnp.concatenate(
            [conv_weight.reshape(2 * C), conv_bias.reshape(1)]).astype(jnp.float32)
        seq2d = seq.reshape(B, C * L)          # free view (row-major contiguous)
        shp2d = shape_or_hm.reshape(B, C * L)
        kernel = functools.partial(_cross_gate_kernel_lanes, C=C, L=L,
                                   gate_dtype=gate_dtype)
        grid_spec = pltpu.PrefetchScalarGridSpec(
            num_scalar_prefetch=0,
            grid=(nb,),
            in_specs=[
                pl.BlockSpec(memory_space=pltpu.MemorySpace.SMEM),   # weights + bias
                pl.BlockSpec((tb, C * L), lambda b: (b, 0)),         # seq
                pl.BlockSpec((tb, C * L), lambda b: (b, 0)),         # shape_or_hm
            ],
            out_specs=pl.BlockSpec((tb, C * L), lambda b: (b, 0)),
        )
        out2d = pl.pallas_call(
            kernel,
            out_shape=jax.ShapeDtypeStruct((B, C * L), out_dtype),
            grid_spec=grid_spec,
            compiler_params=pltpu.CompilerParams(
                dimension_semantics=sem, vmem_limit_bytes=vmem_limit),
            cost_estimate=cost,
        )(params, seq2d, shp2d)
        return out2d.reshape(B, C, L)

    # ---- Path B: generic 3-D layout (C on sublanes) ------------------------
    tb = _pick_tb(B, lambda t: (t, C, L), seq.dtype, hw, block_batch,
                  needs_sublane_rule=False)
    if tb == 0:
        # TODO(synk): one batch row exceeds the VMEM budget; would need an L
        # grid axis with an online softmax.  Fall back to tb=1.
        tb = 1
    nb = B // tb
    vmem_limit = _vmem_limit(_padded_block_bytes((tb, C, L), seq.dtype), hw)
    w_fused = conv_weight.reshape(2, C, 1).astype(jnp.float32)
    bias = conv_bias.reshape(1).astype(jnp.float32)
    kernel = functools.partial(_cross_gate_kernel_3d, gate_dtype=gate_dtype)
    grid_spec = pltpu.PrefetchScalarGridSpec(
        num_scalar_prefetch=0,
        grid=(nb,),
        in_specs=[
            pl.BlockSpec((2, C, 1), lambda b: (0, 0, 0)),            # fused conv weights
            pl.BlockSpec(memory_space=pltpu.MemorySpace.SMEM),       # bias scalar
            pl.BlockSpec((tb, C, L), lambda b: (b, 0, 0)),           # seq
            pl.BlockSpec((tb, C, L), lambda b: (b, 0, 0)),           # shape_or_hm
        ],
        out_specs=pl.BlockSpec((tb, C, L), lambda b: (b, 0, 0)),
    )
    return pl.pallas_call(
        kernel,
        out_shape=jax.ShapeDtypeStruct((B, C, L), out_dtype),
        grid_spec=grid_spec,
        compiler_params=pltpu.CompilerParams(
            dimension_semantics=sem, vmem_limit_bytes=vmem_limit),
        cost_estimate=cost,
    )(w_fused, bias, seq, shape_or_hm)


def cross_gate_ref(seq, shape_or_hm, conv_weight, conv_bias):
    """Pure-JAX reference mirroring the PyTorch forward."""
    cat = jnp.concatenate([seq, shape_or_hm], axis=1)                 # (B, 2C, L)
    logits = jnp.einsum("bcl,oc->bol", cat, conv_weight[:, :, 0]) \
             + conv_bias[None, :, None]                               # (B, 1, L)
    z = jax.nn.relu(logits)
    w = jax.nn.softmax(z, axis=2)
    return shape_or_hm * w


if __name__ == "__main__":
    root = jax.random.PRNGKey(0)

    def _run_case(B, C, L, key):
        k_seq, k_shp, k_w, k_b = jax.random.split(key, 4)
        seq = jax.random.normal(k_seq, (B, C, L), dtype=jnp.float32)
        shape_or_hm = jax.random.normal(k_shp, (B, C, L), dtype=jnp.float32)
        conv_weight = jax.random.normal(k_w, (1, 2 * C, 1), dtype=jnp.float32) * 0.1
        conv_bias = jax.random.normal(k_b, (1,), dtype=jnp.float32) * 0.1

        y = jax.block_until_ready(cross_gate(seq, shape_or_hm, conv_weight, conv_bias))
        y_ref = cross_gate_ref(seq, shape_or_hm, conv_weight, conv_bias)
        assert y.shape == (B, C, L)
        # Exact softmax divide now -> tight tolerance.
        assert jnp.allclose(y, y_ref, atol=1e-5, rtol=1e-4), \
            f"mismatch vs reference at B={B}, C={C}, L={L}"

    # Module-consistent small shape (i_dim=4): exercises the collapsed-C path.
    _run_case(2, 4, 16, jax.random.fold_in(root, 0))
    # C >= 8: exercises the generic 3-D (sublane) path.
    _run_case(2, 8, 16, jax.random.fold_in(root, 1))

    print("KERNEL_OK")
</pallas_src>

<mosaic_0001>
module attributes {stable_mosaic.version = 11 : i64} {
  func.func @_cross_gate_kernel_lanes(%arg0: i32, %arg1: memref<9xf32, #tpu.memory_space<smem>>, %arg2: memref<2x64xf32, #tpu.memory_space<vmem>>, %arg3: memref<2x64xf32, #tpu.memory_space<vmem>>, %arg4: memref<2x64xf32, #tpu.memory_space<vmem>>) attributes {dimension_semantics = [#tpu.dimension_semantics<parallel>], iteration_bounds = array<i64: 1>, scalar_prefetch = 0 : i64, scratch_operands = 0 : i64, tpu.core_type = #tpu.core_type<tc>, window_params = [{transform_indices = @transform_0, window_bounds = array<i64: 9>}, {transform_indices = @transform_1, window_bounds = array<i64: 2, 64>}, {transform_indices = @transform_2, window_bounds = array<i64: 2, 64>}, {transform_indices = @transform_3, window_bounds = array<i64: 2, 64>}]} {
    %c0 = arith.constant 0 : index
    %c0_0 = arith.constant 0 : index
    %0 = vector.load %arg2[%c0, %c0_0] : memref<2x64xf32, #tpu.memory_space<vmem>>, vector<2x64xf32>
    %c0_1 = arith.constant 0 : index
    %c0_2 = arith.constant 0 : index
    %1 = vector.load %arg3[%c0_1, %c0_2] : memref<2x64xf32, #tpu.memory_space<vmem>>, vector<2x64xf32>
    %c0_3 = arith.constant 0 : index
    %2 = memref.load %arg1[%c0_3] : memref<9xf32, #tpu.memory_space<smem>>
    %3 = vector.extract_strided_slice %0 {offsets = [0, 0], sizes = [2, 16], strides = [1, 1]} : vector<2x64xf32> to vector<2x16xf32>
    %4 = vector.broadcast %2 : f32 to vector<2x16xf32>
    %5 = arith.mulf %4, %3 : vector<2x16xf32>
    %c4 = arith.constant 4 : index
    %6 = memref.load %arg1[%c4] : memref<9xf32, #tpu.memory_space<smem>>
    %7 = vector.extract_strided_slice %1 {offsets = [0, 0], sizes = [2, 16], strides = [1, 1]} : vector<2x64xf32> to vector<2x16xf32>
    %8 = vector.broadcast %6 : f32 to vector<2x16xf32>
    %9 = arith.mulf %8, %7 : vector<2x16xf32>
    %10 = arith.addf %5, %9 : vector<2x16xf32>
    %c1 = arith.constant 1 : index
    %11 = memref.load %arg1[%c1] : memref<9xf32, #tpu.memory_space<smem>>
    %12 = vector.extract_strided_slice %0 {offsets = [0, 16], sizes = [2, 16], strides = [1, 1]} : vector<2x64xf32> to vector<2x16xf32>
    %13 = vector.broadcast %11 : f32 to vector<2x16xf32>
    %14 = arith.mulf %13, %12 : vector<2x16xf32>
    %c5 = arith.constant 5 : index
    %15 = memref.load %arg1[%c5] : memref<9xf32, #tpu.memory_space<smem>>
    %16 = vector.extract_strided_slice %1 {offsets = [0, 16], sizes = [2, 16], strides = [1, 1]} : vector<2x64xf32> to vector<2x16xf32>
    %17 = vector.broadcast %15 : f32 to vector<2x16xf32>
    %18 = arith.mulf %17, %16 : vector<2x16xf32>
    %19 = arith.addf %14, %18 : vector<2x16xf32>
    %20 = arith.addf %10, %19 : vector<2x16xf32>
    %c2 = arith.constant 2 : index
    %21 = memref.load %arg1[%c2] : memref<9xf32, #tpu.memory_space<smem>>
    %22 = vector.extract_strided_slice %0 {offsets = [0, 32], sizes = [2, 16], strides = [1, 1]} : vector<2x64xf32> to vector<2x16xf32>
    %23 = vector.broadcast %21 : f32 to vector<2x16xf32>
    %24 = arith.mulf %23, %22 : vector<2x16xf32>
    %c6 = arith.constant 6 : index
    %25 = memref.load %arg1[%c6] : memref<9xf32, #tpu.memory_space<smem>>
    %26 = vector.extract_strided_slice %1 {offsets = [0, 32], sizes = [2, 16], strides = [1, 1]} : vector<2x64xf32> to vector<2x16xf32>
    %27 = vector.broadcast %25 : f32 to vector<2x16xf32>
    %28 = arith.mulf %27, %26 : vector<2x16xf32>
    %29 = arith.addf %24, %28 : vector<2x16xf32>
    %30 = arith.addf %20, %29 : vector<2x16xf32>
    %c3 = arith.constant 3 : index
    %31 = memref.load %arg1[%c3] : memref<9xf32, #tpu.memory_space<smem>>
    %32 = vector.extract_strided_slice %0 {offsets = [0, 48], sizes = [2, 16], strides = [1, 1]} : vector<2x64xf32> to vector<2x16xf32>
    %33 = vector.broadcast %31 : f32 to vector<2x16xf32>
    %34 = arith.mulf %33, %32 : vector<2x16xf32>
    %c7 = arith.constant 7 : index
    %35 = memref.load %arg1[%c7] : memref<9xf32, #tpu.memory_space<smem>>
    %36 = vector.extract_strided_slice %1 {offsets = [0, 48], sizes = [2, 16], strides = [1, 1]} : vector<2x64xf32> to vector<2x16xf32>
    %37 = vector.broadcast %35 : f32 to vector<2x16xf32>
    %38 = arith.mulf %37, %36 : vector<2x16xf32>
    %39 = arith.addf %34, %38 : vector<2x16xf32>
    %40 = arith.addf %30, %39 : vector<2x16xf32>
    %c8 = arith.constant 8 : index
    %41 = memref.load %arg1[%c8] : memref<9xf32, #tpu.memory_space<smem>>
    %42 = vector.broadcast %41 : f32 to vector<2x16xf32>
    %43 = arith.addf %40, %42 : vector<2x16xf32>
    %cst = arith.constant 0.000000e+00 : f32
    %44 = vector.broadcast %cst : f32 to vector<2x16xf32>
    %45 = arith.maximumf %43, %44 : vector<2x16xf32>
    %cst_4 = arith.constant dense<0xFF800000> : vector<2xf32>
    %46 = vector.multi_reduction <maximumf>, %45, %cst_4 [1] : vector<2x16xf32> to vector<2xf32>
    %47 = vector.shape_cast %46 : vector<2xf32> to vector<2x1xf32>
    %48 = vector.broadcast %47 : vector<2x1xf32> to vector<2x16xf32>
    %49 = arith.subf %45, %48 : vector<2x16xf32>
    %50 = math.exp %49 : vector<2x16xf32>
    %cst_5 = arith.constant dense<0.000000e+00> : vector<2xf32>
    %51 = vector.multi_reduction <add>, %50, %cst_5 [1] : vector<2x16xf32> to vector<2xf32>
    %52 = vector.shape_cast %51 : vector<2xf32> to vector<2x1xf32>
    %53 = vector.broadcast %52 : vector<2x1xf32> to vector<2x16xf32>
    %54 = arith.divf %50, %53 : vector<2x16xf32>
    %55 = tpu.concatenate %54, %54, %54, %54 in 1 : vector<2x16xf32>, vector<2x16xf32>, vector<2x16xf32>, vector<2x16xf32> -> vector<2x64xf32>
    %56 = arith.mulf %1, %55 : vector<2x64xf32>
    %c0_6 = arith.constant 0 : index
    %c0_7 = arith.constant 0 : index
    %57 = vector.load %arg4[%c0_6, %c0_7] : memref<2x64xf32, #tpu.memory_space<vmem>>, vector<2x64xf32>
    tpu.vector_store %arg4[%c0_6, %c0_7], %56 {strides = array<i32>} : memref<2x64xf32, #tpu.memory_space<vmem>>, vector<2x64xf32>,
    return
  }
  func.func @transform_0(%arg0: i32) -> i32 {
    %c0_i32 = arith.constant 0 : i32
    %c0_i32_0 = arith.constant 0 : i32
    return %c0_i32 : i32
  }
  func.func @transform_1(%arg0: i32) -> (i32, i32) {
    %c0_i32 = arith.constant 0 : i32
    %c0_i32_0 = arith.constant 0 : i32
    return %arg0, %c0_i32 : i32, i32
  }
  func.func @transform_2(%arg0: i32) -> (i32, i32) {
    %c0_i32 = arith.constant 0 : i32
    %c0_i32_0 = arith.constant 0 : i32
    return %arg0, %c0_i32 : i32, i32
  }
  func.func @transform_3(%arg0: i32) -> (i32, i32) {
    %c0_i32 = arith.constant 0 : i32
    %c0_i32_0 = arith.constant 0 : i32
    return %arg0, %c0_i32 : i32, i32
  }
}

</mosaic_0001>

<llo_original>
// kernel: tpu_custom_call.1
$region0: #{tpu_custom_call.1}
  #allocation0 [shape = 'u32[]', space=smem, size = 0x4, offset = 0x4, fixed_abs, tag = 'smem constant byte address 0x4 - core index']
  #allocation1 [shape = 'u32[72,128]{1,0:T(1,128)}', space=vmem, size = 0x9000, scoped, tag = 'internal scratch']
  %s0 = inlined_call_operand.hbm [shape: f32[9], index: 0, kind: input, shape index: {}]
  %s1 = inlined_call_operand.hbm [shape: f32[2,64], index: 1, kind: input, shape index: {}]
  %s2 = inlined_call_operand.hbm [shape: f32[2,64], index: 2, kind: input, shape index: {}]
  %s3 = inlined_call_operand.hbm [shape: f32[2,64], index: 3, kind: output, shape index: {}]
  %s4 = sld [smem:[#allocation0]]
  $region34: #{tpu_custom_call.1} parent=0
    _
  %s6 = ssub.s32 1, %s4
  %s7 = scalar_select 0, %s6, %s4
  $region1: #{tpu_custom_call.1} parent=0
    #allocation2 [shape = 'u8[512]{0}', space=smem, size = 0x200, scoped, tag = 'input window, operand 0, single buffered']
    #allocation3 [shape = 's32[1]{0}', space=sflag, size = 0x4, scoped, tag = 'scoped memory for tpu_custom_call.1']
    #allocation4 [shape = 's32[1]{0}', space=sflag, size = 0x4, scoped, tag = 'scoped memory for tpu_custom_call.1']
    #allocation5 [shape = 's32[1]{0}', space=sflag, size = 0x4, scoped, tag = 'scoped memory for tpu_custom_call.1']
    #allocation6 [shape = 'u8[1024]{0}', space=vmem, size = 0x400, scoped, tag = 'input window, operand 1, single buffered']
    #allocation7 [shape = 'u8[1024]{0}', space=vmem, size = 0x400, scoped, tag = 'input window, operand 2, single buffered']
    #allocation8 [shape = 's32[1]{0}', space=sflag, size = 0x4, scoped, tag = 'scoped memory for tpu_custom_call.1']
    #allocation9 [shape = 'u8[1024]{0}', space=vmem, size = 0x400, scoped, tag = 'output window, operand 0, single buffered']
    %8 = vsyncpa [#allocation5], 0
    %9 = vsyncpa [#allocation3], 0
    %10 = vsyncpa [#allocation8], 0
    %11 = vsyncpa [#allocation4], 0
    // Predicated region
    $region2: #{tpu_custom_call.1} parent=1 // pred_check
      _
    $region3: #{tpu_custom_call.1} parent=1 // pred_check_branch
      %13 = sbr.rel (0) target = $region5
    $region4: #{tpu_custom_call.1} parent=1 // pred_region
      %15 = vsyncadd [#allocation5], 0
      %s17 = sshll.u32 %s0, 4
      %s18 = int_to_ptr.hbm [resolvable:$true] %s17
      %20 = dma.hbm_to_smem %s18, 16, [#allocation2], [#allocation5]
    $region5: #{tpu_custom_call.1} parent=1 // pred_fallthru
      _
    // Predicated region
    $region6: #{tpu_custom_call.1} parent=1 // pred_check
      _
    $region7: #{tpu_custom_call.1} parent=1 // pred_check_branch
      %22 = sbr.rel (0) target = $region9
    $region8: #{tpu_custom_call.1} parent=1 // pred_region
      %24 = vsyncadd [#allocation3], 0
      %s26 = sshll.u32 %s1, 4
      %s27 = int_to_ptr.hbm [resolvable:$true] %s26
      %s28 = sshll.u32 [#allocation6], 4
      %s29 = int_to_ptr.vmem [resolvable:$true] %s28
      %31 = dma.hbm_to_vmem [thread:$0]  %s27, 32, %s29, [#allocation3]
    $region9: #{tpu_custom_call.1} parent=1 // pred_fallthru
      _
    // Predicated region
    $region10: #{tpu_custom_call.1} parent=1 // pred_check
      _
    $region11: #{tpu_custom_call.1} parent=1 // pred_check_branch
      %33 = sbr.rel (0) target = $region13
    $region12: #{tpu_custom_call.1} parent=1 // pred_region
      %35 = vsyncadd [#allocation8], 0
      %s37 = sshll.u32 %s2, 4
      %s38 = int_to_ptr.hbm [resolvable:$true] %s37
      %s39 = sshll.u32 [#allocation7], 4
      %s40 = int_to_ptr.vmem [resolvable:$true] %s39
      %42 = dma.hbm_to_vmem [thread:$0]  %s38, 32, %s40, [#allocation8]
    $region13: #{tpu_custom_call.1} parent=1 // pred_fallthru
      _
    // Predicated region
    $region14: #{tpu_custom_call.1} parent=1 // pred_check
      _
    $region15: #{tpu_custom_call.1} parent=1 // pred_check_branch
      %44 = sbr.rel (0) target = $region17
    $region16: #{tpu_custom_call.1} parent=1 // pred_region
      %46 = dma.done [#allocation5], 16
    $region17: #{tpu_custom_call.1} parent=1 // pred_fallthru
      _
    // Predicated region
    $region18: #{tpu_custom_call.1} parent=1 // pred_check
      _
    $region19: #{tpu_custom_call.1} parent=1 // pred_check_branch
      %48 = sbr.rel (0) target = $region21
    $region20: #{tpu_custom_call.1} parent=1 // pred_region
      %50 = dma.done [#allocation3], 32
    $region21: #{tpu_custom_call.1} parent=1 // pred_fallthru
      _
    // Predicated region
    $region22: #{tpu_custom_call.1} parent=1 // pred_check
      _
    $region23: #{tpu_custom_call.1} parent=1 // pred_check_branch
      %52 = sbr.rel (0) target = $region25
    $region24: #{tpu_custom_call.1} parent=1 // pred_region
      %54 = dma.done [#allocation8], 32
    $region25: #{tpu_custom_call.1} parent=1 // pred_fallthru
      _
    %55 = sfence
    %v56 = vld [vmem:[#allocation6] sm:$0x3]
    %v57 = vld [vmem:[#allocation7] sm:$0x3]
    %s58 = sld [smem:[#allocation2]]
    %v59 = vstv %s58
    %v60 = vmul.f32 %v59, %v56
    %s61 = sld [smem:[#allocation2 + $0x4]]
    %v62 = vstv %s61
    %v63 = vmul.f32 %v62, %v57
    %v64 = vadd.f32 %v60, %v63
    %s65 = sld [smem:[#allocation2 + $0x1]]
    %v66 = vstv %s65
    %v67 = vmul.f32 %v66, %v56
    %s68 = sld [smem:[#allocation2 + $0x5]]
    %v69 = vstv %s68
    %v70 = vmul.f32 %v69, %v57
    %v71 = vadd.f32 %v67, %v70
    %73 = vrot.lane.b32.xlu0 %v71, 112
    %v74 = vpop.permute.xlu0 %73
    %v76 = vadd.f32 %v64, %v74
    %s77 = sld [smem:[#allocation2 + $0x2]]
    %v78 = vstv %s77
    %v79 = vmul.f32 %v78, %v56
    %s80 = sld [smem:[#allocation2 + $0x6]]
    %v81 = vstv %s80
    %v82 = vmul.f32 %v81, %v57
    %v83 = vadd.f32 %v79, %v82
    %85 = vrot.lane.b32.xlu0 %v83, 96
    %v86 = vpop.permute.xlu0 %85
    %v88 = vadd.f32 %v76, %v86
    %s89 = sld [smem:[#allocation2 + $0x3]]
    %v90 = vstv %s89
    %v91 = vmul.f32 %v90, %v56
    %s92 = sld [smem:[#allocation2 + $0x7]]
    %v93 = vstv %s92
    %v94 = vmul.f32 %v93, %v57
    %v95 = vadd.f32 %v91, %v94
    %97 = vrot.lane.b32.xlu0 %v95, 80
    %v98 = vpop.permute.xlu0 %97
    %v100 = vadd.f32 %v88, %v98
    %s101 = sld [smem:[#allocation2 + $0x8]]
    %v102 = vstv %s101
    %v103 = vadd.f32 %v100, %v102
    %v104 = vmax.f32 %v103, 0.0
    %vm105 = vcmask 123904
    %v106 = vsel %vm105, %v104, -inf
    %107 = vmax.xlane.f32.xlu0 %v106
    %v108 = vpop.xlane.xlu0 %107
    %v109 = vsub.f32 %v104, %v108
    %v110 = vmul.f32 %v109, 1.442695
    %v111 = vpow.pop %v110
    %v112 = vsel %vm105, %v111, 0.0
    %113 = vadd.xlane.f32.xlu0 %v112
    %v114 = vpop.xlane.xlu0 %113
    %v115 = vrcp.pop %v114
    %v116 = vmul.f32 %v114, %v115
    %v117 = vsub.f32 1.0, %v116
    %v118 = vmul.f32 %v115, %v117
    %v119 = vadd.f32 %v115, %v118
    %vm120 = vweird.f32 %v114
    %vm121 = vweird.f32 %v115
    %vm122 = vmor %vm120, %vm121
    %v123 = vsel %vm122, %v115, %v119
    %v124 = vand.u32 2147483647, %v114
    %vm125 = vcmp.eq.f32.partialorder %v124, 8.507059e+37
    %v126 = vand.u32 %v114, 2147483648
    %v127 = vor.u32 1.1754944e-38, %v126
    %v128 = vsel %vm125, %v127, %v123
    %v129 = vmul.f32 %v111, %v128
    %131 = vrot.lane.b32.xlu0 %v129, 16
    %v132 = vpop.permute.xlu0 %131
    %134 = vrot.lane.b32.xlu0 %v129, 32
    %v135 = vpop.permute.xlu0 %134
    %137 = vrot.lane.b32.xlu0 %v129, 48
    %v138 = vpop.permute.xlu0 %137
    %vm140 = vcmask 130048
    %v141 = vsel %vm140, %v129, %v132
    %vm142 = vcmask 261120
    %v143 = vsel %vm142, %v141, %v135
    %vm144 = vcmask 392192
    %v145 = vsel %vm144, %v143, %v138
    %v146 = vmul.f32 %v57, %v145
    %vm147 = vcmask 517120
    %148 = vst.msk [vmem:[#allocation9] sm:$0x3] %vm147, %v146
    // Predicated region
    $region26: #{tpu_custom_call.1} parent=1 // pred_check
      _
    $region27: #{tpu_custom_call.1} parent=1 // pred_check_branch
      %150 = sbr.rel (0) target = $region29
    $region28: #{tpu_custom_call.1} parent=1 // pred_region
      %152 = vsyncadd [#allocation4], 0
      %s154 = sshll.u32 [#allocation9], 4
      %s155 = int_to_ptr.vmem [resolvable:$true] %s154
      %s156 = sshll.u32 %s3, 4
      %s157 = int_to_ptr.hbm [resolvable:$true] %s156
      %159 = dma.vmem_to_hbm [thread:$0]  %s155, 32, %s157, [#allocation4]
    $region29: #{tpu_custom_call.1} parent=1 // pred_fallthru
      _
    // Predicated region
    $region30: #{tpu_custom_call.1} parent=1 // pred_check
      _
    $region31: #{tpu_custom_call.1} parent=1 // pred_check_branch
      %161 = sbr.rel (0) target = $region33
    $region32: #{tpu_custom_call.1} parent=1 // pred_region
      %163 = dma.done [#allocation4], 32
    $region33: #{tpu_custom_call.1} parent=1 // pred_fallthru
      _
    %164 = vsyncpa [#allocation3], 1
    %165 = vsyncpa [#allocation8], 1
    %166 = vsyncpa [#allocation4], 1
    %167 = vsyncpa [#allocation5], 1

</llo_original>
